<compile_context>
chip_gen: v5e
topology: v5e:2x2
jax: 0.10.0
libtpu: 0.0.40
codegen_flags: <defaults>
</compile_context>

<pallas_src>
import functools
import math

import jax
import jax.numpy as jnp
import numpy as np
from jax.experimental import pallas as pl
from jax.experimental.pallas import tpu as pltpu

_SQRT2_M1 = math.sqrt(2.0) - 1.0
_LANES = 128
_BLOCK_ROWS_MAX = 4096          # (4096,128) f32 block = 2 MB
_MIN_SPLIT_ROWS = 1024          # >= 512 KB f32 -> force >= 2 blocks (v7x megacore)
_PCTS = (0.999, 0.9999, 0.99999)
_NUM_CAND = len(_PCTS)


# ---------------------------------------------------------------------------
# shared elementwise math (used by the kernels and by the JAX reference)
# ---------------------------------------------------------------------------
def _quantize_from_log(log2x, delta, two_log2_delta, n_levels):
    # round(-2*log2(x/delta)) == round(2*log2(delta) - 2*log2(x))
    x_int = jnp.round(two_log2_delta - 2.0 * log2x)
    oob = x_int >= n_levels
    x_quant = jnp.clip(x_int, 0.0, float(n_levels - 1))
    # h = floor(q/2); parity = q - 2h  ==>  ceil(q/2) = h + parity, q % 2 = parity
    h = jnp.floor(0.5 * x_quant)
    parity = x_quant - 2.0 * h
    x_float_q = jnp.exp2(-(h + parity)) * (parity * _SQRT2_M1 + 1.0) * delta
    return jnp.where(oob, 0.0, x_float_q)


# ---------------------------------------------------------------------------
# Pallas kernels
# ---------------------------------------------------------------------------
def _quantize_kernel(scal_ref, x_ref, o_ref, *, n_levels):
    # scal_ref: SMEM (2,) f32 = [delta, 2*log2(delta)] ; x_ref/o_ref: VMEM (BR, 128)
    x = x_ref[...].astype(jnp.float32)
    q = _quantize_from_log(jnp.log2(x), scal_ref[0], scal_ref[1], n_levels)
    o_ref[...] = q.astype(o_ref.dtype)


def _sqerr_kernel(deltas_ref, two_log2_ref, x_ref, sse_ref, max_ref,
                  acc_ref, maxacc_ref, *, n_levels):
    # Fused quantize + squared error for all candidate deltas + running max,
    # one pass over x.  acc_ref: (NUM_CAND, 8, 128) f32; maxacc_ref: (8, 128) f32.
    # grid = (ncores, nsteps); each core reduces its own slice of blocks.
    step = pl.program_id(1)

    @pl.when(step == 0)
    def _():
        acc_ref[...] = jnp.zeros_like(acc_ref)
        maxacc_ref[...] = jnp.full_like(maxacc_ref, -jnp.inf)

    x = x_ref[...].astype(jnp.float32)            # (block_rows, 128)
    x3 = x.reshape(-1, 8, _LANES)                 # tile-aligned view -> vregs

    # running max (fallback delta); padded zeros only dilute it for all-negative x
    maxacc_ref[...] = jnp.maximum(maxacc_ref[...], jnp.max(x3, axis=0))

    log2x = jnp.log2(x)                           # one EUP log2, shared by candidates

    for c in range(_NUM_CAND):                    # static unroll
        q = _quantize_from_log(log2x, deltas_ref[c], two_log2_ref[c], n_levels)
        err = x - q
        # pure-VALU sublane-aligned reduce into one vreg, then tiny RMW accumulate
        acc_ref[c] += jnp.sum((err * err).reshape(-1, 8, _LANES), axis=0)

    @pl.when(step == pl.num_programs(1) - 1)
    def _():
        for c in range(_NUM_CAND):
            sse_ref[0, c] = jnp.sum(acc_ref[c], axis=0, keepdims=True)     # (1, 128)
        max_ref[0] = jnp.max(maxacc_ref[...], axis=0, keepdims=True)       # (1, 128)


# ---------------------------------------------------------------------------
# wrappers
# ---------------------------------------------------------------------------
def _prep(x, block_rows_max=_BLOCK_ROWS_MAX):
    """Flatten (keeping dtype) into a lane-dense (rows_padded, 128) view.

    Pads with zeros to an exact block multiple (zeros quantize to 0 and add 0
    error).  Block count is kept even (and >= 2 for medium tensors) so both v7x
    TensorCores get work.  Returns (x2d, n, block_rows, nblocks).
    """
    flat = x.reshape(-1)
    n = flat.shape[0]
    itemsize = jnp.dtype(x.dtype).itemsize
    sub = max(8, 32 // itemsize)                 # native packed sublane multiple
    rows = -(-n // _LANES)
    rows = -(-rows // sub) * sub                 # round rows up to packing

    if rows > block_rows_max:
        nblocks = -(-rows // block_rows_max)
        if nblocks % 2:                          # keep even for the 2-TC sqerr split
            nblocks += 1
    elif rows >= _MIN_SPLIT_ROWS:
        nblocks = 2                              # give both v7x TCs work
    else:
        nblocks = 1

    block_rows = -(-(-(-rows // nblocks)) // sub) * sub   # ceil(rows/nblocks) -> sub mult
    rows_padded = nblocks * block_rows
    if rows_padded * _LANES != n:
        flat = jnp.pad(flat, (0, rows_padded * _LANES - n))   # pad 0.0 -> quantizes to 0
    return flat.reshape(rows_padded, _LANES), n, block_rows, nblocks


def quantize_pallas(x, delta, n_levels):
    x2d, n, block_rows, nblocks = _prep(x)
    delta = jnp.asarray(delta, jnp.float32)
    scal = jnp.stack([delta, 2.0 * jnp.log2(delta)]).reshape(2)
    block_bytes = block_rows * _LANES * jnp.dtype(x.dtype).itemsize

    out2d = pl.pallas_call(
        functools.partial(_quantize_kernel, n_levels=n_levels),
        out_shape=jax.ShapeDtypeStruct(x2d.shape, x.dtype),
        grid=(nblocks,),
        in_specs=[
            pl.BlockSpec(memory_space=pltpu.MemorySpace.SMEM),      # [delta, 2log2(delta)]
            pl.BlockSpec((block_rows, _LANES), lambda i: (i, 0)),   # x tile
        ],
        out_specs=pl.BlockSpec((block_rows, _LANES), lambda i: (i, 0)),
        compiler_params=pltpu.CompilerParams(
            dimension_semantics=("parallel",),
            vmem_limit_bytes=int(4 * block_bytes + (4 << 20))),     # in+out double-buffered
    )(scal, x2d)

    out_flat = out2d.reshape(-1)
    if out_flat.shape[0] != n:
        out_flat = out_flat[:n]
    return out_flat.reshape(x.shape)


def sum_sq_err3_and_max_pallas(x2d, block_rows, nblocks, deltas, n_levels):
    """Single pass over x: SSE for all candidate deltas + global max (fallback delta)."""
    deltas = jnp.asarray(deltas, jnp.float32).reshape(_NUM_CAND)
    two_log2 = 2.0 * jnp.log2(deltas)

    ncores = 2 if (nblocks >= 2 and nblocks % 2 == 0) else 1
    nsteps = nblocks // ncores
    block_bytes = block_rows * _LANES * jnp.dtype(x2d.dtype).itemsize

    sse, xmax = pl.pallas_call(
        functools.partial(_sqerr_kernel, n_levels=n_levels),
        out_shape=(
            jax.ShapeDtypeStruct((ncores, _NUM_CAND, 1, _LANES), jnp.float32),
            jax.ShapeDtypeStruct((ncores, 1, _LANES), jnp.float32),
        ),
        grid=(ncores, nsteps),
        in_specs=[
            pl.BlockSpec(memory_space=pltpu.MemorySpace.SMEM),      # deltas (3,)
            pl.BlockSpec(memory_space=pltpu.MemorySpace.SMEM),      # 2*log2(deltas) (3,)
            pl.BlockSpec((block_rows, _LANES),
                         lambda c, i: (c * nsteps + i, 0)),         # x tile
        ],
        out_specs=(
            pl.BlockSpec((1, _NUM_CAND, 1, _LANES), lambda c, i: (c, 0, 0, 0)),
            pl.BlockSpec((1, 1, _LANES), lambda c, i: (c, 0, 0)),
        ),
        scratch_shapes=[
            pltpu.VMEM((_NUM_CAND, 8, _LANES), jnp.float32),        # per-vreg SSE acc
            pltpu.VMEM((8, _LANES), jnp.float32),                   # per-vreg running max
        ],
        compiler_params=pltpu.CompilerParams(
            dimension_semantics=("parallel", "arbitrary"),
            vmem_limit_bytes=int(2 * block_bytes + (2 << 20))),
    )(deltas, two_log2, x2d)

    sse_per_cand = jnp.sum(sse, axis=(0, 2, 3))    # (3,) SSE per candidate
    x_max = jnp.max(xmax)                          # scalar fallback delta
    return sse_per_cand, x_max


# ---------------------------------------------------------------------------
# module-equivalent wrapper (stateful delta, like the nn.Module)
# ---------------------------------------------------------------------------
class LogSqrt2QuantizerPallas:
    def __init__(self, n_bits: int = 8, channel_wise: bool = False):
        assert 2 <= n_bits <= 8, "bitwidth not supported"
        self.n_bits = n_bits
        self.n_levels = 2 ** n_bits
        self.delta = None
        self.inited = False
        self.channel_wise = channel_wise   # unused in forward, kept for parity

    def set_inited(self, inited: bool = True):
        self.inited = inited

    def init_quantization_scale(self, x):
        n_total = x.size
        x2d, _, block_rows, nblocks = _prep(x)
        # TODO(synk): torch.quantile (sort-based) has no clean Pallas equivalent;
        # computed in plain JAX (single sort for all three percentiles).
        flat32 = x.reshape(-1).astype(jnp.float32)
        cand = jnp.quantile(flat32, jnp.asarray(_PCTS, jnp.float32)).astype(jnp.float32)
        sse, x_max = sum_sq_err3_and_max_pallas(x2d, block_rows, nblocks,
                                                cand, self.n_levels)
        scores = sse / jnp.float32(n_total)            # lp_loss(p=2, 'all')

        delta = x_max                                  # torch default fallback (x.max())
        best_score = jnp.float32(1.0e10)
        for c in range(_NUM_CAND):                     # mirror torch's strict-< update
            take = scores[c] < best_score
            best_score = jnp.where(take, scores[c], best_score)
            delta = jnp.where(take, cand[c], delta)
        return delta

    def __call__(self, x):
        if not self.inited:
            self.delta = self.init_quantization_scale(x)
            self.inited = True
        return quantize_pallas(x, self.delta, self.n_levels)


# ---------------------------------------------------------------------------
# pure-JAX reference (mirrors the PyTorch module) + self-check
# ---------------------------------------------------------------------------
def _ref_forward(x, n_levels):
    x32 = x.astype(jnp.float32)
    flat32 = x32.reshape(-1)
    cand = jnp.quantile(flat32, jnp.asarray(_PCTS, jnp.float32)).astype(jnp.float32)
    delta = jnp.max(flat32)
    best = jnp.float32(1.0e10)
    for c in range(_NUM_CAND):
        d = cand[c]
        q = _quantize_from_log(jnp.log2(x32), d, 2.0 * jnp.log2(d), n_levels)
        s = jnp.mean((x32 - q) ** 2)
        take = s < best
        best = jnp.where(take, s, best)
        delta = jnp.where(take, d, delta)
    q = _quantize_from_log(jnp.log2(x32), delta, 2.0 * jnp.log2(delta), n_levels)
    return q.astype(x.dtype)


if __name__ == "__main__":
    key = jax.random.PRNGKey(0)
    # Positive activations (this quantizer targets post-softmax maps), NCHW.
    x = jax.random.uniform(key, (2, 4, 16, 16), dtype=jnp.float32,
                           minval=1e-4, maxval=1.0)

    quant = LogSqrt2QuantizerPallas(n_bits=8, channel_wise=False)
    y = jax.block_until_ready(quant(x))

    y_ref = jax.block_until_ready(_ref_forward(x, quant.n_levels))
    np.testing.assert_allclose(np.asarray(y), np.asarray(y_ref),
                               rtol=1e-5, atol=1e-6)
    print("KERNEL_OK")
</pallas_src>

<mosaic_0001>
module attributes {stable_mosaic.version = 11 : i64} {
  func.func @_sqerr_kernel(%arg0: i32, %arg1: i32, %arg2: memref<3xf32, #tpu.memory_space<smem>>, %arg3: memref<3xf32, #tpu.memory_space<smem>>, %arg4: memref<16x128xf32, #tpu.memory_space<vmem>>, %arg5: memref<1x3x1x128xf32, #tpu.memory_space<vmem>>, %arg6: memref<1x1x128xf32, #tpu.memory_space<vmem>>, %arg7: memref<3x8x128xf32, #tpu.memory_space<vmem>>, %arg8: memref<8x128xf32, #tpu.memory_space<vmem>>) attributes {dimension_semantics = [#tpu.dimension_semantics<parallel>, #tpu.dimension_semantics<arbitrary>], iteration_bounds = array<i64: 1, 1>, scalar_prefetch = 0 : i64, scratch_operands = 2 : i64, tpu.core_type = #tpu.core_type<tc>, window_params = [{transform_indices = @transform_0, window_bounds = array<i64: 3>}, {transform_indices = @transform_1, window_bounds = array<i64: 3>}, {transform_indices = @transform_2, window_bounds = array<i64: 16, 128>}, {transform_indices = @transform_3, window_bounds = array<i64: 1, 3, 1, 128>}, {transform_indices = @transform_4, window_bounds = array<i64: 1, 1, 128>}]} {
    %c0_i32 = arith.constant 0 : i32
    %0 = arith.cmpi eq, %arg1, %c0_i32 : i32
    %1 = arith.extui %0 : i1 to i32
    %c0_i32_0 = arith.constant 0 : i32
    %2 = arith.cmpi ne, %1, %c0_i32_0 : i32
    scf.if %2 {
      %cst_64 = arith.constant 0.000000e+00 : f32
      %142 = vector.broadcast %cst_64 : f32 to vector<3x8x128xf32>
      %c0_65 = arith.constant 0 : index
      %c0_66 = arith.constant 0 : index
      %c0_67 = arith.constant 0 : index
      %143 = vector.load %arg7[%c0_65, %c0_66, %c0_67] : memref<3x8x128xf32, #tpu.memory_space<vmem>>, vector<3x8x128xf32>
      tpu.vector_store %arg7[%c0_65, %c0_66, %c0_67], %142 {strides = array<i32>} : memref<3x8x128xf32, #tpu.memory_space<vmem>>, vector<3x8x128xf32>,
      %cst_68 = arith.constant 0xFF800000 : f32
      %144 = vector.broadcast %cst_68 : f32 to vector<8x128xf32>
      %c0_69 = arith.constant 0 : index
      %c0_70 = arith.constant 0 : index
      %145 = vector.load %arg8[%c0_69, %c0_70] : memref<8x128xf32, #tpu.memory_space<vmem>>, vector<8x128xf32>
      tpu.vector_store %arg8[%c0_69, %c0_70], %144 {strides = array<i32>} : memref<8x128xf32, #tpu.memory_space<vmem>>, vector<8x128xf32>,
    } else {
    }
    %c0 = arith.constant 0 : index
    %c0_1 = arith.constant 0 : index
    %3 = vector.load %arg4[%c0, %c0_1] : memref<16x128xf32, #tpu.memory_space<vmem>>, vector<16x128xf32>
    %4 = vector.shape_cast %3 : vector<16x128xf32> to vector<2x8x128xf32>
    %c0_2 = arith.constant 0 : index
    %c0_3 = arith.constant 0 : index
    %5 = vector.load %arg8[%c0_2, %c0_3] : memref<8x128xf32, #tpu.memory_space<vmem>>, vector<8x128xf32>
    %cst = arith.constant dense<0xFF800000> : vector<8x128xf32>
    %6 = vector.multi_reduction <maximumf>, %4, %cst [0] : vector<2x8x128xf32> to vector<8x128xf32>
    %7 = arith.maximumf %5, %6 : vector<8x128xf32>
    %c0_4 = arith.constant 0 : index
    %c0_5 = arith.constant 0 : index
    %8 = vector.load %arg8[%c0_4, %c0_5] : memref<8x128xf32, #tpu.memory_space<vmem>>, vector<8x128xf32>
    tpu.vector_store %arg8[%c0_4, %c0_5], %7 {strides = array<i32>} : memref<8x128xf32, #tpu.memory_space<vmem>>, vector<8x128xf32>,
    %9 = math.log %3 : vector<16x128xf32>
    %cst_6 = arith.constant 2.000000e+00 : f32
    %10 = math.log %cst_6 : f32
    %11 = vector.broadcast %10 : f32 to vector<16x128xf32>
    %12 = arith.divf %9, %11 : vector<16x128xf32>
    %c0_7 = arith.constant 0 : index
    %13 = memref.load %arg2[%c0_7] : memref<3xf32, #tpu.memory_space<smem>>
    %c0_8 = arith.constant 0 : index
    %14 = memref.load %arg3[%c0_8] : memref<3xf32, #tpu.memory_space<smem>>
    %cst_9 = arith.constant 2.000000e+00 : f32
    %15 = vector.broadcast %cst_9 : f32 to vector<16x128xf32>
    %16 = arith.mulf %15, %12 : vector<16x128xf32>
    %17 = vector.broadcast %14 : f32 to vector<16x128xf32>
    %18 = arith.subf %17, %16 : vector<16x128xf32>
    %19 = math.roundeven %18 : vector<16x128xf32>
    %cst_10 = arith.constant 2.560000e+02 : f32
    %20 = vector.broadcast %cst_10 : f32 to vector<16x128xf32>
    %21 = arith.cmpf oge, %19, %20 : vector<16x128xf32>
    %cst_11 = arith.constant 0.000000e+00 : f32
    %cst_12 = arith.constant 2.550000e+02 : f32
    %22 = vector.broadcast %cst_11 : f32 to vector<16x128xf32>
    %23 = arith.maximumf %22, %19 : vector<16x128xf32>
    %24 = vector.broadcast %cst_12 : f32 to vector<16x128xf32>
    %25 = arith.minimumf %24, %23 : vector<16x128xf32>
    %cst_13 = arith.constant 5.000000e-01 : f32
    %26 = vector.broadcast %cst_13 : f32 to vector<16x128xf32>
    %27 = arith.mulf %26, %25 : vector<16x128xf32>
    %28 = math.floor %27 : vector<16x128xf32>
    %cst_14 = arith.constant 2.000000e+00 : f32
    %29 = vector.broadcast %cst_14 : f32 to vector<16x128xf32>
    %30 = arith.mulf %29, %28 : vector<16x128xf32>
    %31 = arith.subf %25, %30 : vector<16x128xf32>
    %32 = arith.addf %28, %31 : vector<16x128xf32>
    %cst_15 = arith.constant 0.000000e+00 : f32
    %33 = vector.broadcast %cst_15 : f32 to vector<16x128xf32>
    %34 = arith.subf %33, %32 : vector<16x128xf32>
    %35 = math.exp2 %34 : vector<16x128xf32>
    %cst_16 = arith.constant 0.414213568 : f32
    %36 = vector.broadcast %cst_16 : f32 to vector<16x128xf32>
    %37 = arith.mulf %31, %36 : vector<16x128xf32>
    %cst_17 = arith.constant 1.000000e+00 : f32
    %38 = vector.broadcast %cst_17 : f32 to vector<16x128xf32>
    %39 = arith.addf %37, %38 : vector<16x128xf32>
    %40 = arith.mulf %35, %39 : vector<16x128xf32>
    %41 = vector.broadcast %13 : f32 to vector<16x128xf32>
    %42 = arith.mulf %40, %41 : vector<16x128xf32>
    %cst_18 = arith.constant 0.000000e+00 : f32
    %43 = vector.broadcast %cst_18 : f32 to vector<16x128xf32>
    %44 = arith.select %21, %43, %42 : vector<16x128xi1>, vector<16x128xf32>
    %45 = arith.subf %3, %44 : vector<16x128xf32>
    %c0_19 = arith.constant 0 : index
    %c0_20 = arith.constant 0 : index
    %c0_21 = arith.constant 0 : index
    %46 = vector.load %arg7[%c0_19, %c0_20, %c0_21] : memref<3x8x128xf32, #tpu.memory_space<vmem>>, vector<1x8x128xf32>
    %47 = vector.shape_cast %46 : vector<1x8x128xf32> to vector<8x128xf32>
    %48 = arith.mulf %45, %45 : vector<16x128xf32>
    %49 = vector.shape_cast %48 : vector<16x128xf32> to vector<2x8x128xf32>
    %cst_22 = arith.constant dense<0.000000e+00> : vector<8x128xf32>
    %50 = vector.multi_reduction <add>, %49, %cst_22 [0] : vector<2x8x128xf32> to vector<8x128xf32>
    %51 = arith.addf %47, %50 : vector<8x128xf32>
    %c0_23 = arith.constant 0 : index
    %c0_24 = arith.constant 0 : index
    %c0_25 = arith.constant 0 : index
    %52 = vector.load %arg7[%c0_23, %c0_24, %c0_25] : memref<3x8x128xf32, #tpu.memory_space<vmem>>, vector<1x8x128xf32>
    %53 = vector.shape_cast %52 : vector<1x8x128xf32> to vector<8x128xf32>
    %54 = vector.shape_cast %51 : vector<8x128xf32> to vector<1x8x128xf32>
    tpu.vector_store %arg7[%c0_23, %c0_24, %c0_25], %54 {strides = array<i32>} : memref<3x8x128xf32, #tpu.memory_space<vmem>>, vector<1x8x128xf32>,
    %c1 = arith.constant 1 : index
    %55 = memref.load %arg2[%c1] : memref<3xf32, #tpu.memory_space<smem>>
    %c1_26 = arith.constant 1 : index
    %56 = memref.load %arg3[%c1_26] : memref<3xf32, #tpu.memory_space<smem>>
    %cst_27 = arith.constant 2.000000e+00 : f32
    %57 = vector.broadcast %cst_27 : f32 to vector<16x128xf32>
    %58 = arith.mulf %57, %12 : vector<16x128xf32>
    %59 = vector.broadcast %56 : f32 to vector<16x128xf32>
    %60 = arith.subf %59, %58 : vector<16x128xf32>
    %61 = math.roundeven %60 : vector<16x128xf32>
    %cst_28 = arith.constant 2.560000e+02 : f32
    %62 = vector.broadcast %cst_28 : f32 to vector<16x128xf32>
    %63 = arith.cmpf oge, %61, %62 : vector<16x128xf32>
    %cst_29 = arith.constant 0.000000e+00 : f32
    %cst_30 = arith.constant 2.550000e+02 : f32
    %64 = vector.broadcast %cst_29 : f32 to vector<16x128xf32>
    %65 = arith.maximumf %64, %61 : vector<16x128xf32>
    %66 = vector.broadcast %cst_30 : f32 to vector<16x128xf32>
    %67 = arith.minimumf %66, %65 : vector<16x128xf32>
    %cst_31 = arith.constant 5.000000e-01 : f32
    %68 = vector.broadcast %cst_31 : f32 to vector<16x128xf32>
    %69 = arith.mulf %68, %67 : vector<16x128xf32>
    %70 = math.floor %69 : vector<16x128xf32>
    %cst_32 = arith.constant 2.000000e+00 : f32
    %71 = vector.broadcast %cst_32 : f32 to vector<16x128xf32>
    %72 = arith.mulf %71, %70 : vector<16x128xf32>
    %73 = arith.subf %67, %72 : vector<16x128xf32>
    %74 = arith.addf %70, %73 : vector<16x128xf32>
    %cst_33 = arith.constant 0.000000e+00 : f32
    %75 = vector.broadcast %cst_33 : f32 to vector<16x128xf32>
    %76 = arith.subf %75, %74 : vector<16x128xf32>
    %77 = math.exp2 %76 : vector<16x128xf32>
    %cst_34 = arith.constant 0.414213568 : f32
    %78 = vector.broadcast %cst_34 : f32 to vector<16x128xf32>
    %79 = arith.mulf %73, %78 : vector<16x128xf32>
    %cst_35 = arith.constant 1.000000e+00 : f32
    %80 = vector.broadcast %cst_35 : f32 to vector<16x128xf32>
    %81 = arith.addf %79, %80 : vector<16x128xf32>
    %82 = arith.mulf %77, %81 : vector<16x128xf32>
    %83 = vector.broadcast %55 : f32 to vector<16x128xf32>
    %84 = arith.mulf %82, %83 : vector<16x128xf32>
    %cst_36 = arith.constant 0.000000e+00 : f32
    %85 = vector.broadcast %cst_36 : f32 to vector<16x128xf32>
    %86 = arith.select %63, %85, %84 : vector<16x128xi1>, vector<16x128xf32>
    %87 = arith.subf %3, %86 : vector<16x128xf32>
    %c1_37 = arith.constant 1 : index
    %c0_38 = arith.constant 0 : index
    %c0_39 = arith.constant 0 : index
    %88 = vector.load %arg7[%c1_37, %c0_38, %c0_39] : memref<3x8x128xf32, #tpu.memory_space<vmem>>, vector<1x8x128xf32>
    %89 = vector.shape_cast %88 : vector<1x8x128xf32> to vector<8x128xf32>
    %90 = arith.mulf %87, %87 : vector<16x128xf32>
    %91 = vector.shape_cast %90 : vector<16x128xf32> to vector<2x8x128xf32>
    %cst_40 = arith.constant dense<0.000000e+00> : vector<8x128xf32>
    %92 = vector.multi_reduction <add>, %91, %cst_40 [0] : vector<2x8x128xf32> to vector<8x128xf32>
    %93 = arith.addf %89, %92 : vector<8x128xf32>
    %c1_41 = arith.constant 1 : index
    %c0_42 = arith.constant 0 : index
    %c0_43 = arith.constant 0 : index
    %94 = vector.load %arg7[%c1_41, %c0_42, %c0_43] : memref<3x8x128xf32, #tpu.memory_space<vmem>>, vector<1x8x128xf32>
    %95 = vector.shape_cast %94 : vector<1x8x128xf32> to vector<8x128xf32>
    %96 = vector.shape_cast %93 : vector<8x128xf32> to vector<1x8x128xf32>
    tpu.vector_store %arg7[%c1_41, %c0_42, %c0_43], %96 {strides = array<i32>} : memref<3x8x128xf32, #tpu.memory_space<vmem>>, vector<1x8x128xf32>,
    %c2 = arith.constant 2 : index
    %97 = memref.load %arg2[%c2] : memref<3xf32, #tpu.memory_space<smem>>
    %c2_44 = arith.constant 2 : index
    %98 = memref.load %arg3[%c2_44] : memref<3xf32, #tpu.memory_space<smem>>
    %cst_45 = arith.constant 2.000000e+00 : f32
    %99 = vector.broadcast %cst_45 : f32 to vector<16x128xf32>
    %100 = arith.mulf %99, %12 : vector<16x128xf32>
    %101 = vector.broadcast %98 : f32 to vector<16x128xf32>
    %102 = arith.subf %101, %100 : vector<16x128xf32>
    %103 = math.roundeven %102 : vector<16x128xf32>
    %cst_46 = arith.constant 2.560000e+02 : f32
    %104 = vector.broadcast %cst_46 : f32 to vector<16x128xf32>
    %105 = arith.cmpf oge, %103, %104 : vector<16x128xf32>
    %cst_47 = arith.constant 0.000000e+00 : f32
    %cst_48 = arith.constant 2.550000e+02 : f32
    %106 = vector.broadcast %cst_47 : f32 to vector<16x128xf32>
    %107 = arith.maximumf %106, %103 : vector<16x128xf32>
    %108 = vector.broadcast %cst_48 : f32 to vector<16x128xf32>
    %109 = arith.minimumf %108, %107 : vector<16x128xf32>
    %cst_49 = arith.constant 5.000000e-01 : f32
    %110 = vector.broadcast %cst_49 : f32 to vector<16x128xf32>
    %111 = arith.mulf %110, %109 : vector<16x128xf32>
    %112 = math.floor %111 : vector<16x128xf32>
    %cst_50 = arith.constant 2.000000e+00 : f32
    %113 = vector.broadcast %cst_50 : f32 to vector<16x128xf32>
    %114 = arith.mulf %113, %112 : vector<16x128xf32>
    %115 = arith.subf %109, %114 : vector<16x128xf32>
    %116 = arith.addf %112, %115 : vector<16x128xf32>
    %cst_51 = arith.constant 0.000000e+00 : f32
    %117 = vector.broadcast %cst_51 : f32 to vector<16x128xf32>
    %118 = arith.subf %117, %116 : vector<16x128xf32>
    %119 = math.exp2 %118 : vector<16x128xf32>
    %cst_52 = arith.constant 0.414213568 : f32
    %120 = vector.broadcast %cst_52 : f32 to vector<16x128xf32>
    %121 = arith.mulf %115, %120 : vector<16x128xf32>
    %cst_53 = arith.constant 1.000000e+00 : f32
    %122 = vector.broadcast %cst_53 : f32 to vector<16x128xf32>
    %123 = arith.addf %121, %122 : vector<16x128xf32>
    %124 = arith.mulf %119, %123 : vector<16x128xf32>
    %125 = vector.broadcast %97 : f32 to vector<16x128xf32>
    %126 = arith.mulf %124, %125 : vector<16x128xf32>
    %cst_54 = arith.constant 0.000000e+00 : f32
    %127 = vector.broadcast %cst_54 : f32 to vector<16x128xf32>
    %128 = arith.select %105, %127, %126 : vector<16x128xi1>, vector<16x128xf32>
    %129 = arith.subf %3, %128 : vector<16x128xf32>
    %c2_55 = arith.constant 2 : index
    %c0_56 = arith.constant 0 : index
    %c0_57 = arith.constant 0 : index
    %130 = vector.load %arg7[%c2_55, %c0_56, %c0_57] : memref<3x8x128xf32, #tpu.memory_space<vmem>>, vector<1x8x128xf32>
    %131 = vector.shape_cast %130 : vector<1x8x128xf32> to vector<8x128xf32>
    %132 = arith.mulf %129, %129 : vector<16x128xf32>
    %133 = vector.shape_cast %132 : vector<16x128xf32> to vector<2x8x128xf32>
    %cst_58 = arith.constant dense<0.000000e+00> : vector<8x128xf32>
    %134 = vector.multi_reduction <add>, %133, %cst_58 [0] : vector<2x8x128xf32> to vector<8x128xf32>
    %135 = arith.addf %131, %134 : vector<8x128xf32>
    %c2_59 = arith.constant 2 : index
    %c0_60 = arith.constant 0 : index
    %c0_61 = arith.constant 0 : index
    %136 = vector.load %arg7[%c2_59, %c0_60, %c0_61] : memref<3x8x128xf32, #tpu.memory_space<vmem>>, vector<1x8x128xf32>
    %137 = vector.shape_cast %136 : vector<1x8x128xf32> to vector<8x128xf32>
    %138 = vector.shape_cast %135 : vector<8x128xf32> to vector<1x8x128xf32>
    tpu.vector_store %arg7[%c2_59, %c0_60, %c0_61], %138 {strides = array<i32>} : memref<3x8x128xf32, #tpu.memory_space<vmem>>, vector<1x8x128xf32>,
    %c0_i32_62 = arith.constant 0 : i32
    %139 = arith.cmpi eq, %arg1, %c0_i32_62 : i32
    %140 = arith.extui %139 : i1 to i32
    %c0_i32_63 = arith.constant 0 : i32
    %141 = arith.cmpi ne, %140, %c0_i32_63 : i32
    scf.if %141 {
      %c0_64 = arith.constant 0 : index
      %c0_65 = arith.constant 0 : index
      %c0_66 = arith.constant 0 : index
      %142 = vector.load %arg7[%c0_64, %c0_65, %c0_66] : memref<3x8x128xf32, #tpu.memory_space<vmem>>, vector<1x8x128xf32>
      %143 = vector.shape_cast %142 : vector<1x8x128xf32> to vector<8x128xf32>
      %cst_67 = arith.constant dense<0.000000e+00> : vector<128xf32>
      %144 = vector.multi_reduction <add>, %143, %cst_67 [0] : vector<8x128xf32> to vector<128xf32>
      %145 = vector.shape_cast %144 : vector<128xf32> to vector<1x128xf32>
      %c0_68 = arith.constant 0 : index
      %c0_69 = arith.constant 0 : index
      %c0_70 = arith.constant 0 : index
      %c0_71 = arith.constant 0 : index
      %146 = vector.load %arg5[%c0_68, %c0_69, %c0_70, %c0_71] : memref<1x3x1x128xf32, #tpu.memory_space<vmem>>, vector<1x1x1x128xf32>
      %147 = vector.shape_cast %146 : vector<1x1x1x128xf32> to vector<1x128xf32>
      %148 = vector.shape_cast %145 : vector<1x128xf32> to vector<1x1x1x128xf32>
      tpu.vector_store %arg5[%c0_68, %c0_69, %c0_70, %c0_71], %148 {strides = array<i32>} : memref<1x3x1x128xf32, #tpu.memory_space<vmem>>, vector<1x1x1x128xf32>,
      %c1_72 = arith.constant 1 : index
      %c0_73 = arith.constant 0 : index
      %c0_74 = arith.constant 0 : index
      %149 = vector.load %arg7[%c1_72, %c0_73, %c0_74] : memref<3x8x128xf32, #tpu.memory_space<vmem>>, vector<1x8x128xf32>
      %150 = vector.shape_cast %149 : vector<1x8x128xf32> to vector<8x128xf32>
      %cst_75 = arith.constant dense<0.000000e+00> : vector<128xf32>
      %151 = vector.multi_reduction <add>, %150, %cst_75 [0] : vector<8x128xf32> to vector<128xf32>
      %152 = vector.shape_cast %151 : vector<128xf32> to vector<1x128xf32>
      %c0_76 = arith.constant 0 : index
      %c1_77 = arith.constant 1 : index
      %c0_78 = arith.constant 0 : index
      %c0_79 = arith.constant 0 : index
      %153 = vector.load %arg5[%c0_76, %c1_77, %c0_78, %c0_79] : memref<1x3x1x128xf32, #tpu.memory_space<vmem>>, vector<1x1x1x128xf32>
      %154 = vector.shape_cast %153 : vector<1x1x1x128xf32> to vector<1x128xf32>
      %155 = vector.shape_cast %152 : vector<1x128xf32> to vector<1x1x1x128xf32>
      tpu.vector_store %arg5[%c0_76, %c1_77, %c0_78, %c0_79], %155 {strides = array<i32>} : memref<1x3x1x128xf32, #tpu.memory_space<vmem>>, vector<1x1x1x128xf32>,
      %c2_80 = arith.constant 2 : index
      %c0_81 = arith.constant 0 : index
      %c0_82 = arith.constant 0 : index
      %156 = vector.load %arg7[%c2_80, %c0_81, %c0_82] : memref<3x8x128xf32, #tpu.memory_space<vmem>>, vector<1x8x128xf32>
      %157 = vector.shape_cast %156 : vector<1x8x128xf32> to vector<8x128xf32>
      %cst_83 = arith.constant dense<0.000000e+00> : vector<128xf32>
      %158 = vector.multi_reduction <add>, %157, %cst_83 [0] : vector<8x128xf32> to vector<128xf32>
      %159 = vector.shape_cast %158 : vector<128xf32> to vector<1x128xf32>
      %c0_84 = arith.constant 0 : index
      %c2_85 = arith.constant 2 : index
      %c0_86 = arith.constant 0 : index
      %c0_87 = arith.constant 0 : index
      %160 = vector.load %arg5[%c0_84, %c2_85, %c0_86, %c0_87] : memref<1x3x1x128xf32, #tpu.memory_space<vmem>>, vector<1x1x1x128xf32>
      %161 = vector.shape_cast %160 : vector<1x1x1x128xf32> to vector<1x128xf32>
      %162 = vector.shape_cast %159 : vector<1x128xf32> to vector<1x1x1x128xf32>
      tpu.vector_store %arg5[%c0_84, %c2_85, %c0_86, %c0_87], %162 {strides = array<i32>} : memref<1x3x1x128xf32, #tpu.memory_space<vmem>>, vector<1x1x1x128xf32>,
      %c0_88 = arith.constant 0 : index
      %c0_89 = arith.constant 0 : index
      %163 = vector.load %arg8[%c0_88, %c0_89] : memref<8x128xf32, #tpu.memory_space<vmem>>, vector<8x128xf32>
      %cst_90 = arith.constant dense<0xFF800000> : vector<128xf32>
      %164 = vector.multi_reduction <maximumf>, %163, %cst_90 [0] : vector<8x128xf32> to vector<128xf32>
      %165 = vector.shape_cast %164 : vector<128xf32> to vector<1x128xf32>
      %c0_91 = arith.constant 0 : index
      %c0_92 = arith.constant 0 : index
      %c0_93 = arith.constant 0 : index
      %166 = vector.load %arg6[%c0_91, %c0_92, %c0_93] : memref<1x1x128xf32, #tpu.memory_space<vmem>>, vector<1x1x128xf32>
      %167 = vector.shape_cast %166 : vector<1x1x128xf32> to vector<1x128xf32>
      %168 = vector.shape_cast %165 : vector<1x128xf32> to vector<1x1x128xf32>
      tpu.vector_store %arg6[%c0_91, %c0_92, %c0_93], %168 {strides = array<i32>} : memref<1x1x128xf32, #tpu.memory_space<vmem>>, vector<1x1x128xf32>,
    } else {
    }
    return
  }
  func.func @transform_0(%arg0: i32, %arg1: i32) -> i32 {
    %c0_i32 = arith.constant 0 : i32
    %c0_i32_0 = arith.constant 0 : i32
    return %c0_i32 : i32
  }
  func.func @transform_1(%arg0: i32, %arg1: i32) -> i32 {
    %c0_i32 = arith.constant 0 : i32
    %c0_i32_0 = arith.constant 0 : i32
    return %c0_i32 : i32
  }
  func.func @transform_2(%arg0: i32, %arg1: i32) -> (i32, i32) {
    %c1_i32 = arith.constant 1 : i32
    %0 = arith.muli %arg0, %c1_i32 : i32
    %1 = arith.addi %0, %arg1 : i32
    %c0_i32 = arith.constant 0 : i32
    %c0_i32_0 = arith.constant 0 : i32
    return %1, %c0_i32 : i32, i32
  }
  func.func @transform_3(%arg0: i32, %arg1: i32) -> (i32, i32, i32, i32) {
    %c0_i32 = arith.constant 0 : i32
    %c0_i32_0 = arith.constant 0 : i32
    %c0_i32_1 = arith.constant 0 : i32
    %c0_i32_2 = arith.constant 0 : i32
    return %arg0, %c0_i32, %c0_i32_0, %c0_i32_1 : i32, i32, i32, i32
  }
  func.func @transform_4(%arg0: i32, %arg1: i32) -> (i32, i32, i32) {
    %c0_i32 = arith.constant 0 : i32
    %c0_i32_0 = arith.constant 0 : i32
    %c0_i32_1 = arith.constant 0 : i32
    return %arg0, %c0_i32, %c0_i32_0 : i32, i32, i32
  }
}

</mosaic_0001>

<llo_original>
// kernel: tpu_custom_call.1
$region0: #{tpu_custom_call.1}
  #allocation0 [shape = 'u32[]', space=smem, size = 0x4, offset = 0x4, fixed_abs, tag = 'smem constant byte address 0x4 - core index']
  #allocation1 [shape = 'u32[72,128]{1,0:T(1,128)}', space=vmem, size = 0x9000, scoped, tag = 'internal scratch']
  #allocation2 [shape = 'f32[3,8,128]{2,1,0:T(8,128)}', space=vmem, size = 0x3000, scoped, tag = 'scratch operand']
  #allocation3 [shape = 'f32[8,128]{1,0:T(8,128)}', space=vmem, size = 0x1000, scoped, tag = 'scratch operand']
  %s0 = inlined_call_operand.hbm [shape: f32[3], index: 0, kind: input, shape index: {}]
  %s1 = inlined_call_operand.hbm [shape: f32[3], index: 1, kind: input, shape index: {}]
  %s2 = inlined_call_operand.hbm [shape: f32[16,128], index: 2, kind: input, shape index: {}]
  %s3 = inlined_call_operand.hbm [shape: f32[1,3,1,128], index: 3, kind: output, shape index: {0}]
  %s4 = inlined_call_operand.hbm [shape: f32[1,1,128], index: 4, kind: output, shape index: {1}]
  %5 = xla_tuple %s3, %s4
  %s6 = sld [smem:[#allocation0]]
  $region50: #{tpu_custom_call.1} parent=0
    _
  %s8 = ssub.s32 1, %s6
  %s9 = scalar_select 0, %s8, %s6
  $region1: #{tpu_custom_call.1} parent=0
    #allocation4 [shape = 'u8[512]{0}', space=smem, size = 0x200, scoped, tag = 'input window, operand 0, single buffered']
    #allocation5 [shape = 's32[1]{0}', space=sflag, size = 0x4, scoped, tag = 'scoped memory for tpu_custom_call.1']
    #allocation6 [shape = 's32[1]{0}', space=sflag, size = 0x4, scoped, tag = 'scoped memory for tpu_custom_call.1']
    #allocation7 [shape = 's32[1]{0}', space=sflag, size = 0x4, scoped, tag = 'scoped memory for tpu_custom_call.1']
    #allocation8 [shape = 'u8[512]{0}', space=smem, size = 0x200, scoped, tag = 'input window, operand 1, single buffered']
    #allocation9 [shape = 's32[1]{0}', space=sflag, size = 0x4, scoped, tag = 'scoped memory for tpu_custom_call.1']
    #allocation10 [shape = 'u8[8192]{0}', space=vmem, size = 0x2000, scoped, tag = 'input window, operand 2, single buffered']
    #allocation11 [shape = 'u8[1536]{0}', space=vmem, size = 0x800, scoped, tag = 'output window, operand 0, single buffered']
    #allocation12 [shape = 'u8[512]{0}', space=vmem, size = 0x400, scoped, tag = 'output window, operand 1, single buffered']
    #allocation13 [shape = 's32[1]{0}', space=sflag, size = 0x4, scoped, tag = 'scoped memory for tpu_custom_call.1']
    %10 = vsyncpa [#allocation7], 0
    %11 = vsyncpa [#allocation9], 0
    %12 = vsyncpa [#allocation5], 0
    %13 = vsyncpa [#allocation6], 0
    %14 = vsyncpa [#allocation13], 0
    // Predicated region
    $region2: #{tpu_custom_call.1} parent=1 // pred_check
      _
    $region3: #{tpu_custom_call.1} parent=1 // pred_check_branch
      %16 = sbr.rel (0) target = $region5
    $region4: #{tpu_custom_call.1} parent=1 // pred_region
      %18 = vsyncadd [#allocation7], 0
      %s20 = sshll.u32 %s0, 4
      %s21 = int_to_ptr.hbm [resolvable:$true] %s20
      %23 = dma.hbm_to_smem %s21, 16, [#allocation4], [#allocation7]
    $region5: #{tpu_custom_call.1} parent=1 // pred_fallthru
      _
    // Predicated region
    $region6: #{tpu_custom_call.1} parent=1 // pred_check
      _
    $region7: #{tpu_custom_call.1} parent=1 // pred_check_branch
      %25 = sbr.rel (0) target = $region9
    $region8: #{tpu_custom_call.1} parent=1 // pred_region
      %27 = vsyncadd [#allocation9], 0
      %s29 = sshll.u32 %s1, 4
      %s30 = int_to_ptr.hbm [resolvable:$true] %s29
      %32 = dma.hbm_to_smem %s30, 16, [#allocation8], [#allocation9]
    $region9: #{tpu_custom_call.1} parent=1 // pred_fallthru
      _
    // Predicated region
    $region10: #{tpu_custom_call.1} parent=1 // pred_check
      _
    $region11: #{tpu_custom_call.1} parent=1 // pred_check_branch
      %34 = sbr.rel (0) target = $region13
    $region12: #{tpu_custom_call.1} parent=1 // pred_region
      %s35 = sadd.s32 0, 0
      %s36 = smul.u32 2, %s35
      %38 = vsyncadd [#allocation5], 0
      %s39 = smul.addr %s36, 8
      %s40 = scalar_lea.hbm %s2, %s39
      %s41 = sshll.u32 %s40, 4
      %s42 = int_to_ptr.hbm [resolvable:$true] %s41
      %s43 = sshll.u32 [#allocation10], 4
      %s44 = int_to_ptr.vmem [resolvable:$true] %s43
      %49 = dma.hbm_to_vmem [thread:$0]  %s42, 256, %s44, [#allocation5], 128, 128, 8
    $region13: #{tpu_custom_call.1} parent=1 // pred_fallthru
      _
    // Predicated region
    $region14: #{tpu_custom_call.1} parent=1 // pred_check
      _
    $region15: #{tpu_custom_call.1} parent=1 // pred_check_branch
      %51 = sbr.rel (0) target = $region17
    $region16: #{tpu_custom_call.1} parent=1 // pred_region
      %53 = dma.done [#allocation7], 16
    $region17: #{tpu_custom_call.1} parent=1 // pred_fallthru
      _
    // Predicated region
    $region18: #{tpu_custom_call.1} parent=1 // pred_check
      _
    $region19: #{tpu_custom_call.1} parent=1 // pred_check_branch
      %55 = sbr.rel (0) target = $region21
    $region20: #{tpu_custom_call.1} parent=1 // pred_region
      %57 = dma.done [#allocation9], 16
    $region21: #{tpu_custom_call.1} parent=1 // pred_fallthru
      _
    // Predicated region
    $region22: #{tpu_custom_call.1} parent=1 // pred_check
      _
    $region23: #{tpu_custom_call.1} parent=1 // pred_check_branch
      %59 = sbr.rel (0) target = $region25
    $region24: #{tpu_custom_call.1} parent=1 // pred_region
      %61 = dma.done [#allocation5], 256
    $region25: #{tpu_custom_call.1} parent=1 // pred_fallthru
      _
    %62 = sfence
    %s63 = sadd.s32 0, 0
    %s64 = smul.u32 2, %s63
    %p65 = scmp.eq.s32.totalorder 0, 0
    // Predicated region
    $region26: #{tpu_custom_call.1} parent=1 // pred_check
      %p66 = pneg %p65
    $region27: #{tpu_custom_call.1} parent=1 // pred_check_branch
      %68 = sbr.rel (%p66) target = $region29
    $region28: #{tpu_custom_call.1} parent=1 // pred_region
      %69 = vst [vmem:[#allocation2] sm:$0xff] 0.0
      %70 = vst [vmem:[#allocation2 + $0x8] sm:$0xff] 0.0
      %71 = vst [vmem:[#allocation2 + $0x10] sm:$0xff] 0.0
      %72 = vst [vmem:[#allocation3] sm:$0xff] -inf
    $region29: #{tpu_custom_call.1} parent=1 // pred_fallthru
      _
    %v73 = vld [vmem:[#allocation10] sm:$0xff]
    %v74 = vld [vmem:[#allocation10 + $0x8] sm:$0xff]
    %v75 = vld [vmem:[#allocation3] sm:$0xff]
    %v76 = vmax.f32 %v73, %v74
    %v77 = vmax.f32 %v75, %v76
    %78 = vst [vmem:[#allocation3] sm:$0xff] %v77
    %v79 = vlog2.pop %v73
    %v80 = vmul.f32 %v79, 0.6931472
    %v81 = vlog2.pop %v74
    %v82 = vmul.f32 %v81, 0.6931472
    %v83 = vrcp.pop 0.6931472
    %v84 = vmul.f32 0.6931472, %v83
    %v85 = vsub.f32 1.0, %v84
    %v86 = vmul.f32 %v83, %v85
    %v87 = vadd.f32 %v83, %v86
    %vm88 = vweird.f32 %v83
    %v89 = vsel %vm88, %v83, %v87
    %v90 = vmul.f32 %v80, %v89
    %v91 = vmul.f32 %v82, %v89
    %s92 = sld [smem:[#allocation4]]
    %s93 = sld [smem:[#allocation8]]
    %v94 = vmul.f32 %v90, 2.0
    %v95 = vmul.f32 %v91, 2.0
    %v96 = vstv %s93
    %v97 = vsub.f32 %v96, %v94
    %v98 = vsub.f32 %v96, %v95
    %v99 = vround.ne.pseudo %v97
    %v100 = vround.ne.pseudo %v98
    %vm101 = vcmp.ge.f32.partialorder %v99, 256.0
    %vm102 = vcmp.ge.f32.partialorder %v100, 256.0
    %v103 = vmax.f32 %v99, 0.0
    %v104 = vmax.f32 %v100, 0.0
    %v105 = vmin.f32 %v103, 255.0
    %v106 = vmin.f32 %v104, 255.0
    %v107 = vmul.f32 %v105, 0.5
    %v108 = vmul.f32 %v106, 0.5
    %v109 = vfloor.f32 %v107
    %v110 = vfloor.f32 %v108
    %v111 = vmul.f32 %v109, 2.0
    %v112 = vmul.f32 %v110, 2.0
    %v113 = vsub.f32 %v105, %v111
    %v114 = vsub.f32 %v106, %v112
    %v115 = vadd.f32 %v109, %v113
    %v116 = vadd.f32 %v110, %v114
    %v117 = vsub.f32 0.0, %v115
    %v118 = vsub.f32 0.0, %v116
    %v119 = vpow.pop %v117
    %v120 = vpow.pop %v118
    %v121 = vmul.f32 %v113, 0.41421357
    %v122 = vmul.f32 %v114, 0.41421357
    %v123 = vadd.f32 %v121, 1.0
    %v124 = vadd.f32 %v122, 1.0
    %v125 = vmul.f32 %v119, %v123
    %v126 = vmul.f32 %v120, %v124
    %v127 = vstv %s92
    %v128 = vmul.f32 %v125, %v127
    %v129 = vmul.f32 %v126, %v127
    %v130 = vsel %vm101, 0.0, %v128
    %v131 = vsel %vm102, 0.0, %v129
    %v132 = vsub.f32 %v73, %v130
    %v133 = vsub.f32 %v74, %v131
    %v134 = vld [vmem:[#allocation2] sm:$0xff]
    %v135 = vmul.f32 %v132, %v132
    %v136 = vmul.f32 %v133, %v133
    %v137 = vadd.f32 %v135, %v136
    %v138 = vadd.f32 %v134, %v137
    %139 = vst [vmem:[#allocation2] sm:$0xff] %v138
    %s140 = sld [smem:[#allocation4 + $0x1]]
    %s141 = sld [smem:[#allocation8 + $0x1]]
    %v142 = vstv %s141
    %v143 = vsub.f32 %v142, %v94
    %v144 = vsub.f32 %v142, %v95
    %v145 = vround.ne.pseudo %v143
    %v146 = vround.ne.pseudo %v144
    %vm147 = vcmp.ge.f32.partialorder %v145, 256.0
    %vm148 = vcmp.ge.f32.partialorder %v146, 256.0
    %v149 = vmax.f32 %v145, 0.0
    %v150 = vmax.f32 %v146, 0.0
    %v151 = vmin.f32 %v149, 255.0
    %v152 = vmin.f32 %v150, 255.0
    %v153 = vmul.f32 %v151, 0.5
    %v154 = vmul.f32 %v152, 0.5
    %v155 = vfloor.f32 %v153
    %v156 = vfloor.f32 %v154
    %v157 = vmul.f32 %v155, 2.0
    %v158 = vmul.f32 %v156, 2.0
    %v159 = vsub.f32 %v151, %v157
    %v160 = vsub.f32 %v152, %v158
    %v161 = vadd.f32 %v155, %v159
    %v162 = vadd.f32 %v156, %v160
    %v163 = vsub.f32 0.0, %v161
    %v164 = vsub.f32 0.0, %v162
    %v165 = vpow.pop %v163
    %v166 = vpow.pop %v164
    %v167 = vmul.f32 %v159, 0.41421357
    %v168 = vmul.f32 %v160, 0.41421357
    %v169 = vadd.f32 %v167, 1.0
    %v170 = vadd.f32 %v168, 1.0
    %v171 = vmul.f32 %v165, %v169
    %v172 = vmul.f32 %v166, %v170
    %v173 = vstv %s140
    %v174 = vmul.f32 %v171, %v173
    %v175 = vmul.f32 %v172, %v173
    %v176 = vsel %vm147, 0.0, %v174
    %v177 = vsel %vm148, 0.0, %v175
    %v178 = vsub.f32 %v73, %v176
    %v179 = vsub.f32 %v74, %v177
    %s180 = scalar_lea.vmem [#allocation2], 8
    %v181 = vld [vmem:[%s180] sm:$0xff]
    %v182 = vmul.f32 %v178, %v178
    %v183 = vmul.f32 %v179, %v179
    %v184 = vadd.f32 %v182, %v183
    %v185 = vadd.f32 %v181, %v184
    %186 = vst [vmem:[%s180] sm:$0xff] %v185
    %s187 = sld [smem:[#allocation4 + $0x2]]
    %s188 = sld [smem:[#allocation8 + $0x2]]
    %v189 = vstv %s188
    %v190 = vsub.f32 %v189, %v94
    %v191 = vsub.f32 %v189, %v95
    %v192 = vround.ne.pseudo %v190
    %v193 = vround.ne.pseudo %v191
    %vm194 = vcmp.ge.f32.partialorder %v192, 256.0
    %vm195 = vcmp.ge.f32.partialorder %v193, 256.0
    %v196 = vmax.f32 %v192, 0.0
    %v197 = vmax.f32 %v193, 0.0
    %v198 = vmin.f32 %v196, 255.0
    %v199 = vmin.f32 %v197, 255.0
    %v200 = vmul.f32 %v198, 0.5
    %v201 = vmul.f32 %v199, 0.5
    %v202 = vfloor.f32 %v200
    %v203 = vfloor.f32 %v201
    %v204 = vmul.f32 %v202, 2.0
    %v205 = vmul.f32 %v203, 2.0
    %v206 = vsub.f32 %v198, %v204
    %v207 = vsub.f32 %v199, %v205
    %v208 = vadd.f32 %v202, %v206
    %v209 = vadd.f32 %v203, %v207
    %v210 = vsub.f32 0.0, %v208
    %v211 = vsub.f32 0.0, %v209
    %v212 = vpow.pop %v210
    %v213 = vpow.pop %v211
    %v214 = vmul.f32 %v206, 0.41421357
    %v215 = vmul.f32 %v207, 0.41421357
    %v216 = vadd.f32 %v214, 1.0
    %v217 = vadd.f32 %v215, 1.0
    %v218 = vmul.f32 %v212, %v216
    %v219 = vmul.f32 %v213, %v217
    %v220 = vstv %s187
    %v221 = vmul.f32 %v218, %v220
    %v222 = vmul.f32 %v219, %v220
    %v223 = vsel %vm194, 0.0, %v221
    %v224 = vsel %vm195, 0.0, %v222
    %v225 = vsub.f32 %v73, %v223
    %v226 = vsub.f32 %v74, %v224
    %s227 = scalar_lea.vmem [#allocation2], 16
    %v228 = vld [vmem:[%s227] sm:$0xff]
    %v229 = vmul.f32 %v225, %v225
    %v230 = vmul.f32 %v226, %v226
    %v231 = vadd.f32 %v229, %v230
    %v232 = vadd.f32 %v228, %v231
    %233 = vst [vmem:[%s227] sm:$0xff] %v232
    // Predicated region
    $region30: #{tpu_custom_call.1} parent=1 // pred_check
      %p234 = pneg %p65
    $region31: #{tpu_custom_call.1} parent=1 // pred_check_branch
      %236 = sbr.rel (%p234) target = $region33
    $region32: #{tpu_custom_call.1} parent=1 // pred_region
      %v237 = vld [vmem:[#allocation2] sm:$0xff]
      %v238 = vrot.slane %v237, 4
      %v239 = vadd.f32 %v237, %v238
      %v240 = vrot.slane %v239, 2
      %v241 = vadd.f32 %v239, %v240
      %v242 = vrot.slane %v241, 1
      %v243 = vadd.f32 %v241, %v242
      %244 = vst [vmem:[#allocation11] sm:$0x1] %v243
      %v245 = vld [vmem:[%s180] sm:$0xff]
      %v246 = vrot.slane %v245, 4
      %v247 = vadd.f32 %v245, %v246
      %v248 = vrot.slane %v247, 2
      %v249 = vadd.f32 %v247, %v248
      %v250 = vrot.slane %v249, 1
      %v251 = vadd.f32 %v249, %v250
      %s252 = scalar_lea.vmem [#allocation11], 1
      %253 = vst [vmem:[%s252] sm:$0x1] %v251
      %v254 = vld [vmem:[%s227] sm:$0xff]
      %v255 = vrot.slane %v254, 4
      %v256 = vadd.f32 %v254, %v255
      %v257 = vrot.slane %v256, 2
      %v258 = vadd.f32 %v256, %v257
      %v259 = vrot.slane %v258, 1
      %v260 = vadd.f32 %v258, %v259
      %s261 = scalar_lea.vmem [#allocation11], 2
      %262 = vst [vmem:[%s261] sm:$0x1] %v260
      %v263 = vld [vmem:[#allocation3] sm:$0xff]
      %v264 = vrot.slane %v263, 4
      %v265 = vmax.f32 %v263, %v264
      %v266 = vrot.slane %v265, 2
      %v267 = vmax.f32 %v265, %v266
      %v268 = vrot.slane %v267, 1
      %v269 = vmax.f32 %v267, %v268
      %270 = vst [vmem:[#allocation12] sm:$0x1] %v269
    $region33: #{tpu_custom_call.1} parent=1 // pred_fallthru
      _
    // Predicated region
    $region34: #{tpu_custom_call.1} parent=1 // pred_check
      _
    $region35: #{tpu_custom_call.1} parent=1 // pred_check_branch
      %272 = sbr.rel (0) target = $region37
    $region36: #{tpu_custom_call.1} parent=1 // pred_region
      %274 = vsyncadd [#allocation6], 0
      %s275 = sshll.u32 [#allocation11], 4
      %s276 = int_to_ptr.vmem [resolvable:$true] %s275
      %s277 = sshll.u32 %s3, 4
      %s278 = int_to_ptr.hbm [resolvable:$true] %s277
      %283 = dma.vmem_to_hbm [thread:$0]  %s276, 48, %s278, [#allocation6], 16, 16, 1
    $region37: #{tpu_custom_call.1} parent=1 // pred_fallthru
      _
    // Predicated region
    $region38: #{tpu_custom_call.1} parent=1 // pred_check
      _
    $region39: #{tpu_custom_call.1} parent=1 // pred_check_branch
      %285 = sbr.rel (0) target = $region41
    $region40: #{tpu_custom_call.1} parent=1 // pred_region
      %287 = vsyncadd [#allocation13], 0
      %s289 = sshll.u32 [#allocation12], 4
      %s290 = int_to_ptr.vmem [resolvable:$true] %s289
      %s291 = sshll.u32 %s4, 4
      %s292 = int_to_ptr.hbm [resolvable:$true] %s291
      %294 = dma.vmem_to_hbm [thread:$0]  %s290, 16, %s292, [#allocation13]
    $region41: #{tpu_custom_call.1} parent=1 // pred_fallthru
      _
    // Predicated region
    $region42: #{tpu_custom_call.1} parent=1 // pred_check
      _
    $region43: #{tpu_custom_call.1} parent=1 // pred_check_branch
      %296 = sbr.rel (0) target = $region45
    $region44: #{tpu_custom_call.1} parent=1 // pred_region
      %298 = dma.done [#allocation6], 48
    $region45: #{tpu_custom_call.1} parent=1 // pred_fallthru
      _
    // Predicated region
    $region46: #{tpu_custom_call.1} parent=1 // pred_check
      _
    $region47: #{tpu_custom_call.1} parent=1 // pred_check_branch
      %300 = sbr.rel (0) target = $region49
    $region48: #{tpu_custom_call.1} parent=1 // pred_region
      %302 = dma.done [#allocation13], 16
    $region49: #{tpu_custom_call.1} parent=1 // pred_fallthru
      _
    %303 = vsyncpa [#allocation5], 1
    %304 = vsyncpa [#allocation6], 1
    %305 = vsyncpa [#allocation13], 1
    %306 = vsyncpa [#allocation7], 1
    %307 = vsyncpa [#allocation9], 1

</llo_original>
